<compile_context>
chip_gen: v7x
topology: tpu7x:2x2x1
jax: 0.10.0
libtpu: 0.0.40
codegen_flags: <defaults>
</compile_context>

<pallas_src>
import functools

import jax
import jax.numpy as jnp
import numpy as np
from jax import lax
from jax.experimental import pallas as pl
from jax.experimental.pallas import tpu as pltpu

EPS = 1e-5  # nn.InstanceNorm2d default


def _resnet_block_kernel(x_ref, w_ref, b_ref, o_ref, patch_ref, *, width):
    """Per-sample kernel, lane-dense layout.

    x_ref    : (C, H*W)   f32 input (residual branch reads the same tile)
    w_ref    : (C, 9*C)   f32 conv weight, tap-major (kh, kw) then input channel
    b_ref    : (C, 1)     f32 conv bias
    o_ref    : (C, H*W)   output
    patch_ref: (9*C, H*W) f32 VMEM scratch holding the im2col patches
    """
    C, L = x_ref.shape
    W = width
    x = x_ref[...]                                    # (C, L) f32

    lane = lax.broadcasted_iota(jnp.int32, (C, L), 1)
    h_first = lane < W                                # h == 0
    h_last = lane >= L - W                            # h == H-1
    if (W & (W - 1)) == 0:                            # power-of-two width fast path
        w_in_row = jnp.bitwise_and(lane, W - 1)
    else:
        # TODO(synk): relies on integer-mod vector lowering for non-pow2 widths.
        w_in_row = lane % W
    w_first = w_in_row == 0
    w_last = w_in_row == W - 1

    # Row-shifted planes with reflection at the h boundaries (lane rolls -> XLU slot,
    # no sublane-relayout slice copies).
    nxt_row = pltpu.roll(x, (L - W) % L, 1)           # x[c, h+1, w] (wraps at h=H-1)
    prv_row = pltpu.roll(x, W % L, 1)                 # x[c, h-1, w] (wraps at h=0)
    h_planes = (
        jnp.where(h_first, nxt_row, prv_row),         # dh = -1 : reflect row -1 -> 1
        x,                                            # dh =  0
        jnp.where(h_last, prv_row, nxt_row),          # dh = +1 : reflect row H -> H-2
    )

    # im2col: pack the 9 reflection-padded taps into the (9C, L) scratch.
    for kh, p in enumerate(h_planes):
        nxt_col = pltpu.roll(p, L - 1, 1)             # p[c, h, w+1]
        prv_col = pltpu.roll(p, 1, 1)                 # p[c, h, w-1]
        w_planes = (
            jnp.where(w_first, nxt_col, prv_col),     # dw = -1 : reflect col -1 -> 1
            p,                                        # dw =  0
            jnp.where(w_last, prv_col, nxt_col),      # dw = +1 : reflect col W -> W-2
        )
        for kw, q in enumerate(w_planes):
            t = kh * 3 + kw
            patch_ref[t * C:(t + 1) * C, :] = q

    # Single fused MXU matmul: (C, 9C) x (9C, L) -> (C, L). bf16 inputs, f32 accum.
    conv = lax.dot_general(
        w_ref[...].astype(jnp.bfloat16),
        patch_ref[...].astype(jnp.bfloat16),
        dimension_numbers=(((1,), (0,)), ((), ())),
        preferred_element_type=jnp.float32)
    conv = conv + b_ref[...]                          # (C, 1) bias broadcast over lanes

    # InstanceNorm2d (affine=False, biased variance) over the spatial (lane) axis.
    mean = jnp.mean(conv, axis=1, keepdims=True)      # (C, 1)
    centered = conv - mean                            # reused for var and for y
    var = jnp.mean(centered * centered, axis=1, keepdims=True)
    y = centered * lax.rsqrt(var + EPS)

    y = jnp.maximum(y, 0.0)                           # ReLU
    o_ref[...] = (x + y).astype(o_ref.dtype)          # residual add, lane-dense store


def resnet_block_forward(x_nchw, w_oihw, bias):
    """x: (N, C, H, W) f32, w: (C, C, 3, 3) OIHW, bias: (C,). Returns (N, C, H, W)."""
    N, C, H, W = x_nchw.shape
    L = H * W

    # Free reshape: NCHW is already channel-major, so (N, C, H*W) needs no transpose.
    x2 = x_nchw.reshape(N, C, L)
    # OIHW -> (C_out, 9*C_in), tap-major (kh, kw) then input channel; matches the row
    # order of the im2col scratch built inside the kernel.
    w2 = jnp.transpose(w_oihw, (0, 2, 3, 1)).reshape(C, 9 * C)
    b2 = bias.reshape(C, 1)

    kernel = functools.partial(_resnet_block_kernel, width=W)
    out = pl.pallas_call(
        kernel,
        out_shape=jax.ShapeDtypeStruct((N, C, L), x_nchw.dtype),
        grid_spec=pltpu.PrefetchScalarGridSpec(
            num_scalar_prefetch=0,
            grid=(N,),                                            # one sample / step
            in_specs=[
                pl.BlockSpec((None, C, L), lambda n: (n, 0, 0)),  # x (batch squeezed)
                pl.BlockSpec((C, 9 * C), lambda n: (0, 0)),       # weight (resident)
                pl.BlockSpec((C, 1), lambda n: (0, 0)),           # bias
            ],
            out_specs=pl.BlockSpec((None, C, L), lambda n: (n, 0, 0)),
            scratch_shapes=[pltpu.VMEM((9 * C, L), jnp.float32)],  # im2col patches
        ),
        compiler_params=pltpu.CompilerParams(
            dimension_semantics=("parallel",),        # batch across TCs (v7x megacore)
            vmem_limit_bytes=32 * 1024 * 1024,        # v5e scoped default is 16 MiB
        ),
    )(x2, w2, b2)
    return out.reshape(N, C, H, W)


def _reference_forward(x_nchw, w_oihw, bias):
    """Pure-JAX f32 reference mirroring the PyTorch module."""
    x = jnp.transpose(x_nchw, (0, 2, 3, 1))
    xp = jnp.pad(x, ((0, 0), (1, 1), (1, 1), (0, 0)), mode="reflect")
    w_hwio = jnp.transpose(w_oihw, (2, 3, 1, 0))
    conv = lax.conv_general_dilated(
        xp, w_hwio, window_strides=(1, 1), padding="VALID",
        dimension_numbers=("NHWC", "HWIO", "NHWC"))
    conv = conv + bias[None, None, None, :]
    mean = jnp.mean(conv, axis=(1, 2), keepdims=True)
    var = jnp.mean((conv - mean) ** 2, axis=(1, 2), keepdims=True)
    y = (conv - mean) * lax.rsqrt(var + EPS)
    y = jnp.maximum(y, 0.0)
    out = x + y
    return jnp.transpose(out, (0, 3, 1, 2))


if __name__ == "__main__":
    N, C, H, W = 2, 4, 16, 16

    key = jax.random.PRNGKey(0)
    kx, kw, kb = jax.random.split(key, 3)

    x = jax.random.normal(kx, (N, C, H, W), dtype=jnp.float32)
    # Conv2d(dim, dim, 3) params in PyTorch layout (OIHW), deterministic init.
    fan_in = C * 3 * 3
    bound = 1.0 / np.sqrt(fan_in)
    w = jax.random.uniform(kw, (C, C, 3, 3), jnp.float32, -bound, bound)
    b = jax.random.uniform(kb, (C,), jnp.float32, -bound, bound)

    out = jax.block_until_ready(resnet_block_forward(x, w, b))
    ref = jax.block_until_ready(_reference_forward(x, w, b))

    # bf16 MXU inputs (with f32 accumulation) loosen agreement with the f32 reference.
    np.testing.assert_allclose(np.asarray(out), np.asarray(ref), atol=5e-2, rtol=5e-2)

    print("KERNEL_OK")
</pallas_src>

<mosaic_0001>
module attributes {stable_mosaic.version = 11 : i64} {
  func.func @_resnet_block_kernel(%arg0: i32, %arg1: memref<1x4x256xf32, #tpu.memory_space<vmem>>, %arg2: memref<4x36xf32, #tpu.memory_space<vmem>>, %arg3: memref<4x1xf32, #tpu.memory_space<vmem>>, %arg4: memref<1x4x256xf32, #tpu.memory_space<vmem>>, %arg5: memref<36x256xf32, #tpu.memory_space<vmem>>) attributes {dimension_semantics = [#tpu.dimension_semantics<parallel>], iteration_bounds = array<i64: 2>, scalar_prefetch = 0 : i64, scratch_operands = 1 : i64, tpu.core_type = #tpu.core_type<tc>, window_params = [{transform_indices = @transform_0, window_bounds = array<i64: 1, 4, 256>}, {pipeline_mode = #tpu.pipeline_mode<synchronous>, transform_indices = @transform_1, window_bounds = array<i64: 4, 36>}, {pipeline_mode = #tpu.pipeline_mode<synchronous>, transform_indices = @transform_2, window_bounds = array<i64: 4, 1>}, {transform_indices = @transform_3, window_bounds = array<i64: 1, 4, 256>}]} {
    %c0 = arith.constant 0 : index
    %c0_0 = arith.constant 0 : index
    %c0_1 = arith.constant 0 : index
    %0 = vector.load %arg1[%c0, %c0_0, %c0_1] : memref<1x4x256xf32, #tpu.memory_space<vmem>>, vector<1x4x256xf32>
    %1 = vector.shape_cast %0 : vector<1x4x256xf32> to vector<4x256xf32>
    %2 = tpu.iota {dimensions = array<i32: 1>} : vector<4x256xi32>
    %c16_i32 = arith.constant 16 : i32
    %3 = vector.broadcast %c16_i32 : i32 to vector<4x256xi32>
    %4 = arith.cmpi slt, %2, %3 : vector<4x256xi32>
    %c240_i32 = arith.constant 240 : i32
    %5 = vector.broadcast %c240_i32 : i32 to vector<4x256xi32>
    %6 = arith.cmpi sge, %2, %5 : vector<4x256xi32>
    %c15_i32 = arith.constant 15 : i32
    %7 = vector.broadcast %c15_i32 : i32 to vector<4x256xi32>
    %8 = arith.andi %2, %7 : vector<4x256xi32>
    %c0_i32 = arith.constant 0 : i32
    %9 = vector.broadcast %c0_i32 : i32 to vector<4x256xi32>
    %10 = arith.cmpi eq, %8, %9 : vector<4x256xi32>
    %c15_i32_2 = arith.constant 15 : i32
    %11 = vector.broadcast %c15_i32_2 : i32 to vector<4x256xi32>
    %12 = arith.cmpi eq, %8, %11 : vector<4x256xi32>
    %c240_i32_3 = arith.constant 240 : i32
    %13 = tpu.dynamic_rotate %1 by %c240_i32_3 dim 1 : vector<4x256xf32>, i32 -> vector<4x256xf32>
    %c16_i32_4 = arith.constant 16 : i32
    %14 = tpu.dynamic_rotate %1 by %c16_i32_4 dim 1 : vector<4x256xf32>, i32 -> vector<4x256xf32>
    %15 = arith.select %4, %13, %14 : vector<4x256xi1>, vector<4x256xf32>
    %16 = arith.select %6, %14, %13 : vector<4x256xi1>, vector<4x256xf32>
    %c255_i32 = arith.constant 255 : i32
    %17 = tpu.dynamic_rotate %15 by %c255_i32 dim 1 : vector<4x256xf32>, i32 -> vector<4x256xf32>
    %c1_i32 = arith.constant 1 : i32
    %18 = tpu.dynamic_rotate %15 by %c1_i32 dim 1 : vector<4x256xf32>, i32 -> vector<4x256xf32>
    %19 = arith.select %10, %17, %18 : vector<4x256xi1>, vector<4x256xf32>
    %20 = arith.select %12, %18, %17 : vector<4x256xi1>, vector<4x256xf32>
    %c0_5 = arith.constant 0 : index
    %c0_6 = arith.constant 0 : index
    %21 = vector.load %arg5[%c0_5, %c0_6] : memref<36x256xf32, #tpu.memory_space<vmem>>, vector<4x256xf32>
    tpu.vector_store %arg5[%c0_5, %c0_6], %19 {strides = array<i32>} : memref<36x256xf32, #tpu.memory_space<vmem>>, vector<4x256xf32>,
    %c4 = arith.constant 4 : index
    %c0_7 = arith.constant 0 : index
    %22 = vector.load %arg5[%c4, %c0_7] : memref<36x256xf32, #tpu.memory_space<vmem>>, vector<4x256xf32>
    tpu.vector_store %arg5[%c4, %c0_7], %15 {strides = array<i32>} : memref<36x256xf32, #tpu.memory_space<vmem>>, vector<4x256xf32>,
    %c8 = arith.constant 8 : index
    %c0_8 = arith.constant 0 : index
    %23 = vector.load %arg5[%c8, %c0_8] : memref<36x256xf32, #tpu.memory_space<vmem>>, vector<4x256xf32>
    tpu.vector_store %arg5[%c8, %c0_8], %20 {strides = array<i32>} : memref<36x256xf32, #tpu.memory_space<vmem>>, vector<4x256xf32>,
    %c255_i32_9 = arith.constant 255 : i32
    %24 = tpu.dynamic_rotate %1 by %c255_i32_9 dim 1 : vector<4x256xf32>, i32 -> vector<4x256xf32>
    %c1_i32_10 = arith.constant 1 : i32
    %25 = tpu.dynamic_rotate %1 by %c1_i32_10 dim 1 : vector<4x256xf32>, i32 -> vector<4x256xf32>
    %26 = arith.select %10, %24, %25 : vector<4x256xi1>, vector<4x256xf32>
    %27 = arith.select %12, %25, %24 : vector<4x256xi1>, vector<4x256xf32>
    %c12 = arith.constant 12 : index
    %c0_11 = arith.constant 0 : index
    %28 = vector.load %arg5[%c12, %c0_11] : memref<36x256xf32, #tpu.memory_space<vmem>>, vector<4x256xf32>
    tpu.vector_store %arg5[%c12, %c0_11], %26 {strides = array<i32>} : memref<36x256xf32, #tpu.memory_space<vmem>>, vector<4x256xf32>,
    %c16 = arith.constant 16 : index
    %c0_12 = arith.constant 0 : index
    %29 = vector.load %arg5[%c16, %c0_12] : memref<36x256xf32, #tpu.memory_space<vmem>>, vector<4x256xf32>
    tpu.vector_store %arg5[%c16, %c0_12], %1 {strides = array<i32>} : memref<36x256xf32, #tpu.memory_space<vmem>>, vector<4x256xf32>,
    %c20 = arith.constant 20 : index
    %c0_13 = arith.constant 0 : index
    %30 = vector.load %arg5[%c20, %c0_13] : memref<36x256xf32, #tpu.memory_space<vmem>>, vector<4x256xf32>
    tpu.vector_store %arg5[%c20, %c0_13], %27 {strides = array<i32>} : memref<36x256xf32, #tpu.memory_space<vmem>>, vector<4x256xf32>,
    %c255_i32_14 = arith.constant 255 : i32
    %31 = tpu.dynamic_rotate %16 by %c255_i32_14 dim 1 : vector<4x256xf32>, i32 -> vector<4x256xf32>
    %c1_i32_15 = arith.constant 1 : i32
    %32 = tpu.dynamic_rotate %16 by %c1_i32_15 dim 1 : vector<4x256xf32>, i32 -> vector<4x256xf32>
    %33 = arith.select %10, %31, %32 : vector<4x256xi1>, vector<4x256xf32>
    %34 = arith.select %12, %32, %31 : vector<4x256xi1>, vector<4x256xf32>
    %c24 = arith.constant 24 : index
    %c0_16 = arith.constant 0 : index
    %35 = vector.load %arg5[%c24, %c0_16] : memref<36x256xf32, #tpu.memory_space<vmem>>, vector<4x256xf32>
    tpu.vector_store %arg5[%c24, %c0_16], %33 {strides = array<i32>} : memref<36x256xf32, #tpu.memory_space<vmem>>, vector<4x256xf32>,
    %c28 = arith.constant 28 : index
    %c0_17 = arith.constant 0 : index
    %36 = vector.load %arg5[%c28, %c0_17] : memref<36x256xf32, #tpu.memory_space<vmem>>, vector<4x256xf32>
    tpu.vector_store %arg5[%c28, %c0_17], %16 {strides = array<i32>} : memref<36x256xf32, #tpu.memory_space<vmem>>, vector<4x256xf32>,
    %c32 = arith.constant 32 : index
    %c0_18 = arith.constant 0 : index
    %37 = vector.load %arg5[%c32, %c0_18] : memref<36x256xf32, #tpu.memory_space<vmem>>, vector<4x256xf32>
    tpu.vector_store %arg5[%c32, %c0_18], %34 {strides = array<i32>} : memref<36x256xf32, #tpu.memory_space<vmem>>, vector<4x256xf32>,
    %c0_19 = arith.constant 0 : index
    %c0_20 = arith.constant 0 : index
    %38 = vector.load %arg2[%c0_19, %c0_20] : memref<4x36xf32, #tpu.memory_space<vmem>>, vector<4x36xf32>
    %39 = arith.truncf %38 : vector<4x36xf32> to vector<4x36xbf16>
    %c0_21 = arith.constant 0 : index
    %c0_22 = arith.constant 0 : index
    %40 = vector.load %arg5[%c0_21, %c0_22] : memref<36x256xf32, #tpu.memory_space<vmem>>, vector<36x256xf32>
    %41 = arith.truncf %40 : vector<36x256xf32> to vector<36x256xbf16>
    %cst = arith.constant dense<0.000000e+00> : vector<4x256xf32>
    %42 = tpu.matmul %39, %41, %cst {dimension_numbers = #tpu.dot_dimension_numbers<[1], [0], [0], [1], [0, 0, 1, 1], [], []>} : vector<4x36xbf16>, vector<36x256xbf16>, vector<4x256xf32> -> vector<4x256xf32>
    %c0_23 = arith.constant 0 : index
    %c0_24 = arith.constant 0 : index
    %43 = vector.load %arg3[%c0_23, %c0_24] : memref<4x1xf32, #tpu.memory_space<vmem>>, vector<4x1xf32>
    %44 = vector.broadcast %43 : vector<4x1xf32> to vector<4x256xf32>
    %45 = arith.addf %42, %44 : vector<4x256xf32>
    %cst_25 = arith.constant dense<0.000000e+00> : vector<4xf32>
    %46 = vector.multi_reduction <add>, %45, %cst_25 [1] : vector<4x256xf32> to vector<4xf32>
    %47 = vector.shape_cast %46 : vector<4xf32> to vector<4x1xf32>
    %cst_26 = arith.constant 2.560000e+02 : f32
    %48 = vector.broadcast %cst_26 : f32 to vector<4x1xf32>
    %49 = arith.divf %47, %48 : vector<4x1xf32>
    %50 = vector.broadcast %49 : vector<4x1xf32> to vector<4x256xf32>
    %51 = arith.subf %45, %50 : vector<4x256xf32>
    %52 = arith.mulf %51, %51 : vector<4x256xf32>
    %cst_27 = arith.constant dense<0.000000e+00> : vector<4xf32>
    %53 = vector.multi_reduction <add>, %52, %cst_27 [1] : vector<4x256xf32> to vector<4xf32>
    %54 = vector.shape_cast %53 : vector<4xf32> to vector<4x1xf32>
    %cst_28 = arith.constant 2.560000e+02 : f32
    %55 = vector.broadcast %cst_28 : f32 to vector<4x1xf32>
    %56 = arith.divf %54, %55 : vector<4x1xf32>
    %cst_29 = arith.constant 9.99999974E-6 : f32
    %57 = vector.broadcast %cst_29 : f32 to vector<4x1xf32>
    %58 = arith.addf %56, %57 : vector<4x1xf32>
    %59 = math.rsqrt %58 : vector<4x1xf32>
    %60 = vector.broadcast %59 : vector<4x1xf32> to vector<4x256xf32>
    %61 = arith.mulf %51, %60 : vector<4x256xf32>
    %cst_30 = arith.constant 0.000000e+00 : f32
    %62 = vector.broadcast %cst_30 : f32 to vector<4x256xf32>
    %63 = arith.maximumf %61, %62 : vector<4x256xf32>
    %64 = arith.addf %1, %63 : vector<4x256xf32>
    %c0_31 = arith.constant 0 : index
    %c0_32 = arith.constant 0 : index
    %c0_33 = arith.constant 0 : index
    %65 = vector.load %arg4[%c0_31, %c0_32, %c0_33] : memref<1x4x256xf32, #tpu.memory_space<vmem>>, vector<1x4x256xf32>
    %66 = vector.shape_cast %65 : vector<1x4x256xf32> to vector<4x256xf32>
    %67 = vector.shape_cast %64 : vector<4x256xf32> to vector<1x4x256xf32>
    tpu.vector_store %arg4[%c0_31, %c0_32, %c0_33], %67 {strides = array<i32>} : memref<1x4x256xf32, #tpu.memory_space<vmem>>, vector<1x4x256xf32>,
    return
  }
  func.func @transform_0(%arg0: i32) -> (i32, i32, i32) {
    %c0_i32 = arith.constant 0 : i32
    %c0_i32_0 = arith.constant 0 : i32
    %c0_i32_1 = arith.constant 0 : i32
    return %arg0, %c0_i32, %c0_i32_0 : i32, i32, i32
  }
  func.func @transform_1(%arg0: i32) -> (i32, i32) {
    %c0_i32 = arith.constant 0 : i32
    %c0_i32_0 = arith.constant 0 : i32
    %c0_i32_1 = arith.constant 0 : i32
    return %c0_i32, %c0_i32_0 : i32, i32
  }
  func.func @transform_2(%arg0: i32) -> (i32, i32) {
    %c0_i32 = arith.constant 0 : i32
    %c0_i32_0 = arith.constant 0 : i32
    %c0_i32_1 = arith.constant 0 : i32
    return %c0_i32, %c0_i32_0 : i32, i32
  }
  func.func @transform_3(%arg0: i32) -> (i32, i32, i32) {
    %c0_i32 = arith.constant 0 : i32
    %c0_i32_0 = arith.constant 0 : i32
    %c0_i32_1 = arith.constant 0 : i32
    return %arg0, %c0_i32, %c0_i32_0 : i32, i32, i32
  }
}

</mosaic_0001>

<llo_original>
// kernel: tpu_custom_call.1
$region0: #{tpu_custom_call.1}
  #allocation0 [shape = 'u32[]', space=smem, size = 0x4, offset = 0x4, fixed_abs, tag = 'smem constant byte address 0x4 - core index']
  #allocation1 [shape = 'u32[144,128]{1,0:T(1,128)}', space=vmem, size = 0x12000, scoped, tag = 'internal scratch']
  #allocation2 [shape = 'f32[36,256]{1,0:T(8,128)}', space=vmem, size = 0xa000, scoped, tag = 'scratch operand']
  %s0 = inlined_call_operand.hbm [shape: f32[2,4,256], index: 0, kind: input, shape index: {}]
  %s1 = inlined_call_operand.vmem [shape: f32[4,36], index: 1, kind: input, shape index: {}]
  %s2 = inlined_call_operand.vmem [shape: f32[4,1], index: 2, kind: input, shape index: {}]
  %s3 = inlined_call_operand.hbm [shape: f32[2,4,256], index: 3, kind: output, shape index: {}]
  %s4 = sld [smem:[#allocation0]]
  $region49: #{tpu_custom_call.1} parent=0
    _
  %s6 = ssub.s32 1, %s4
  %s7 = scalar_select 0, %s6, %s4
  $region1: #{tpu_custom_call.1} parent=0
    #allocation3 [shape = 'u8[8192]{0}', space=vmem, size = 0x2000, scoped, tag = 'input window, operand 0']
    #allocation4 [shape = 's32[2]{0}', space=sflag, size = 0x8, scoped, tag = 'scoped memory for tpu_custom_call.1']
    #allocation5 [shape = 's32[2]{0}', space=sflag, size = 0x8, scoped, tag = 'scoped memory for tpu_custom_call.1']
    #allocation6 [shape = 'u8[8192]{0}', space=vmem, size = 0x2000, scoped, tag = 'output window, operand 0']
    %8 = vsyncpa [#allocation4], 0
    %s9 = scalar_lea.sflag [#allocation4], 1
    %10 = vsyncpa %s9, 0
    %11 = vsyncpa [#allocation5], 0
    %s12 = scalar_lea.sflag [#allocation5], 1
    %13 = vsyncpa %s12, 0
    loop: start=0, step=1, limit=4
    $region2: #{tpu_custom_call.1} parent=1 // loop_pre_header
      _
    $region3: #{tpu_custom_call.1} parent=1 // loop_header
      %s15 = sphi 0, %s19
      %p16 = scmp.ge.s32.totalorder %s15, 4
      %s25 = sphi 0, %s27
      %s28 = sphi 0, %s25
      %s29 = sphi 0, %s28
      %s45 = sphi 0, %s29
      %s49 = sphi 0, %s49
      %s51 = sphi 0, %s49
      %s52 = sphi 0, %s51
      %s66 = sphi 0, %s52
      %s70 = sphi 0, %s70
      %s72 = sphi 0, %s70
      %s73 = sphi 0, %s72
      %s87 = sphi 0, %s73
      %s93 = sphi 0, %s95
      %s96 = sphi 0, %s93
      %s97 = sphi 0, %s96
      %s113 = sphi 0, %s97
    $region4: #{tpu_custom_call.1} parent=1 // loop_header_branch
      %18 = sbr.rel (%p16) target = $region8
    $region5: #{tpu_custom_call.1} parent=1 // loop_body
      %s20 = ssub.s32 %s15, 1
      %s21 = ssub.s32 %s15, 2
      %s22 = sadd.s32 %s15, 1
      %s23 = ssub.s32 %s15, %s22
      %p24 = scmp.eq.s32.totalorder %s23, 0
      %s26 = sadd.s32 %s25, 1
      %s27 = scalar_select %p24, %s25, %s26
      %p30 = pneg %p24
      %p31 = scmp.eq.s32.totalorder %s15, 1
      %p32 = por %p30, %p31
      %p33 = scmp.ne.s32.totalorder %s25, %s28
      %p34 = scmp.eq.s32.totalorder %s15, 0
      %p35 = por %p33, %p34
      %p36 = scmp.ne.s32.totalorder %s25, %s28
      %p37 = scmp.eq.s32.totalorder %s20, 1
      %p38 = por %p36, %p37
      %p39 = scmp.ne.s32.totalorder %s28, %s29
      %p40 = scmp.eq.s32.totalorder %s20, 0
      %p41 = por %p39, %p40
      %p42 = scmp.ne.s32.totalorder %s28, %s29
      %p43 = scmp.eq.s32.totalorder %s21, 1
      %p44 = por %p42, %p43
      %p46 = scmp.ne.s32.totalorder %s29, %s45
      %p47 = scmp.eq.s32.totalorder %s21, 0
      %p48 = por %p46, %p47
      %s50 = sadd.s32 %s49, 1
      %p53 = scmp.eq.s32.totalorder %s15, 1
      %p54 = scmp.ne.s32.totalorder %s49, %s51
      %p55 = scmp.eq.s32.totalorder %s15, 0
      %p56 = por %p54, %p55
      %p57 = scmp.ne.s32.totalorder %s49, %s51
      %p58 = scmp.eq.s32.totalorder %s20, 1
      %p59 = por %p57, %p58
      %p60 = scmp.ne.s32.totalorder %s51, %s52
      %p61 = scmp.eq.s32.totalorder %s20, 0
      %p62 = por %p60, %p61
      %p63 = scmp.ne.s32.totalorder %s51, %s52
      %p64 = scmp.eq.s32.totalorder %s21, 1
      %p65 = por %p63, %p64
      %p67 = scmp.ne.s32.totalorder %s52, %s66
      %p68 = scmp.eq.s32.totalorder %s21, 0
      %p69 = por %p67, %p68
      %s71 = sadd.s32 %s70, 1
      %p74 = scmp.eq.s32.totalorder %s15, 1
      %p75 = scmp.ne.s32.totalorder %s70, %s72
      %p76 = scmp.eq.s32.totalorder %s15, 0
      %p77 = por %p75, %p76
      %p78 = scmp.ne.s32.totalorder %s70, %s72
      %p79 = scmp.eq.s32.totalorder %s20, 1
      %p80 = por %p78, %p79
      %p81 = scmp.ne.s32.totalorder %s72, %s73
      %p82 = scmp.eq.s32.totalorder %s20, 0
      %p83 = por %p81, %p82
      %p84 = scmp.ne.s32.totalorder %s72, %s73
      %p85 = scmp.eq.s32.totalorder %s21, 1
      %p86 = por %p84, %p85
      %p88 = scmp.ne.s32.totalorder %s73, %s87
      %p89 = scmp.eq.s32.totalorder %s21, 0
      %p90 = por %p88, %p89
      %s91 = ssub.s32 %s15, %s22
      %p92 = scmp.eq.s32.totalorder %s91, 0
      %s94 = sadd.s32 %s93, 1
      %s95 = scalar_select %p92, %s93, %s94
      %p98 = pneg %p92
      %p99 = scmp.eq.s32.totalorder %s15, 1
      %p100 = por %p98, %p99
      %p101 = scmp.ne.s32.totalorder %s93, %s96
      %p102 = scmp.eq.s32.totalorder %s15, 0
      %p103 = por %p101, %p102
      %p104 = scmp.ne.s32.totalorder %s93, %s96
      %p105 = scmp.eq.s32.totalorder %s20, 1
      %p106 = por %p104, %p105
      %p107 = scmp.ne.s32.totalorder %s96, %s97
      %p108 = scmp.eq.s32.totalorder %s20, 0
      %p109 = por %p107, %p108
      %p110 = scmp.ne.s32.totalorder %s96, %s97
      %p111 = scmp.eq.s32.totalorder %s21, 1
      %p112 = por %p110, %p111
      %p114 = scmp.ne.s32.totalorder %s97, %s113
      %p115 = scmp.eq.s32.totalorder %s21, 0
      %p116 = por %p114, %p115
      %p117 = scmp.le.s32.totalorder 1, %s15
      %p118 = scmp.lt.s32.totalorder %s15, 3
      %p119 = pnand %p117, %p118
      %p120 = pneg %p119
      // Predicated region
      $region9: #{tpu_custom_call.1} parent=5 // pred_check
        _
      $region10: #{tpu_custom_call.1} parent=5 // pred_check_branch
        %122 = sbr.rel (%p119) target = $region12
      $region11: #{tpu_custom_call.1} parent=5 // pred_region
        %s123 = ssub.s32 %s15, 1
        // Predicated region
        $region13: #{tpu_custom_call.1} parent=11 // pred_check
          %p124 = pneg %p62
        $region14: #{tpu_custom_call.1} parent=11 // pred_check_branch
          %126 = sbr.rel (%p124) target = $region16
        $region15: #{tpu_custom_call.1} parent=11 // pred_region
          _
        $region16: #{tpu_custom_call.1} parent=11 // pred_fallthru
          _
        // Predicated region
        $region17: #{tpu_custom_call.1} parent=11 // pred_check
          %p127 = pneg %p83
        $region18: #{tpu_custom_call.1} parent=11 // pred_check_branch
          %129 = sbr.rel (%p127) target = $region20
        $region19: #{tpu_custom_call.1} parent=11 // pred_region
          _
        $region20: #{tpu_custom_call.1} parent=11 // pred_fallthru
          _
      $region12: #{tpu_custom_call.1} parent=5 // pred_fallthru
        _
      %p130 = scmp.lt.s32.totalorder %s15, 2
      // Predicated region
      $region21: #{tpu_custom_call.1} parent=5 // pred_check
        %p131 = pneg %p130
      $region22: #{tpu_custom_call.1} parent=5 // pred_check_branch
        %133 = sbr.rel (%p131) target = $region24
      $region23: #{tpu_custom_call.1} parent=5 // pred_region
        // Predicated region
        $region25: #{tpu_custom_call.1} parent=23 // pred_check
          %p134 = pneg %p35
        $region26: #{tpu_custom_call.1} parent=23 // pred_check_branch
          %136 = sbr.rel (%p134) target = $region28
        $region27: #{tpu_custom_call.1} parent=23 // pred_region
          %s137 = sand.u32 %s25, 1
          %s138 = scalar_lea.sflag [#allocation4], %s137
          %s139 = sand.u32 %s25, 1
          %s140 = smul.addr %s139, 8
          %s141 = scalar_lea.vmem [#allocation3], %s140
          %s143 = ssub.s32 128, 128
          %144 = vsyncadd %s138, %s143
          %s145 = smul.addr %s15, 2
          %s146 = smul.addr %s145, 64
          %s147 = scalar_lea.hbm %s0, %s146
          %s149 = sshll.u32 %s141, 4
          %s150 = int_to_ptr.vmem [resolvable:$true] %s149
          %152 = dma.hbm_to_vmem [thread:$0]  %s147, 128, %s150, %s138
        $region28: #{tpu_custom_call.1} parent=23 // pred_fallthru
          _
      $region24: #{tpu_custom_call.1} parent=5 // pred_fallthru
        _
      %p153 = scmp.le.s32.totalorder 1, %s15
      %p154 = scmp.lt.s32.totalorder %s15, 3
      %p155 = pnand %p153, %p154
      %p156 = pneg %p155
      // Predicated region
      $region29: #{tpu_custom_call.1} parent=5 // pred_check
        _
      $region30: #{tpu_custom_call.1} parent=5 // pred_check_branch
        %158 = sbr.rel (%p155) target = $region32
      $region31: #{tpu_custom_call.1} parent=5 // pred_region
        %s159 = ssub.s32 %s15, 1
        %s160 = sand.u32 %s28, 1
        %s161 = scalar_lea.sflag [#allocation4], %s160
        %s162 = sand.u32 %s28, 1
        %s163 = smul.addr %s162, 8
        %s164 = scalar_lea.vmem [#allocation3], %s163
        // Predicated region
        $region33: #{tpu_custom_call.1} parent=31 // pred_check
          %p165 = pneg %p41
        $region34: #{tpu_custom_call.1} parent=31 // pred_check_branch
          %167 = sbr.rel (%p165) target = $region36
        $region35: #{tpu_custom_call.1} parent=31 // pred_region
          %168 = dma.done %s161, 128
        $region36: #{tpu_custom_call.1} parent=31 // pred_fallthru
          _
        %s169 = sand.u32 %s28, 1
        %s170 = scalar_lea.sflag [#allocation4], %s169
        %s171 = sand.u32 %s28, 1
        %s172 = smul.addr %s171, 8
        %s173 = scalar_lea.vmem [#allocation3], %s172
        %p174 = pneg %p41
        %p175 = pneg %p38
        %p176 = pneg %p62
        %p177 = pneg %p59
        %p178 = pneg %p83
        %p179 = pneg %p80
        %p180 = pneg %p109
        %p181 = pneg %p106
        %s182 = sand.u32 %s96, 1
        %s183 = scalar_lea.sflag [#allocation5], %s182
        %s184 = sand.u32 %s96, 1
        %s185 = smul.addr %s184, 8
        %s186 = scalar_lea.vmem [#allocation6], %s185
        %v188 = vld [vmem:[%s164] sm:$0xff]
        %v189 = vlaneseq
        %v190 = vand.u32 %v189, 127
        %v191 = vadd.s32 %v190, 128
        %vm192 = vcmp.lt.s32.totalorder %v190, 16
        %vm193 = vcmp.lt.s32.totalorder %v191, 16
        %vm194 = vcmp.ge.s32.totalorder %v190, 240
        %vm195 = vcmp.ge.s32.totalorder %v191, 240
        %v196 = vand.u32 %v190, 15
        %v197 = vand.u32 %v191, 15
        %vm198 = vcmp.eq.s32.totalorder %v196, 0
        %vm199 = vcmp.eq.s32.totalorder %v197, 0
        %vm200 = vcmp.eq.s32.totalorder %v196, 15
        %vm201 = vcmp.eq.s32.totalorder %v197, 15
        %v203 = vcombine.high %v188, %v188
        %205 = vrot.lane.b32.xlu0 %v188, 112
        %v206 = vpop.permute.xlu0 %205
        %207 = vrot.lane.b32.xlu0 %v203, 112
        %v208 = vpop.permute.xlu0 %207
        %vm209 = vcmp.lt.s32.totalorder %v190, 112
        %v210 = vsel %vm209, %v206, %v208
        %v211 = vsel %vm209, %v208, %v206
        %212 = vrot.lane.b32.xlu0 %v188, 16
        %v213 = vpop.permute.xlu0 %212
        %214 = vrot.lane.b32.xlu0 %v203, 16
        %v215 = vpop.permute.xlu0 %214
        %v216 = vsel %vm192, %v213, %v215
        %v217 = vsel %vm192, %v215, %v213
        %v218 = vsel %vm192, %v210, %v217
        %v219 = vsel %vm193, %v211, %v216
        %v220 = vsel %vm194, %v217, %v210
        %v221 = vsel %vm195, %v216, %v211
        %222 = vrot.lane.b32.xlu0 %v218, 127
        %v223 = vpop.permute.xlu0 %222
        %224 = vrot.lane.b32.xlu0 %v219, 127
        %v225 = vpop.permute.xlu0 %224
        %vm226 = vcmp.lt.s32.totalorder %v190, 127
        %v227 = vsel %vm226, %v223, %v225
        %v228 = vsel %vm226, %v225, %v223
        %229 = vrot.lane.b32.xlu0 %v218, 1
        %v230 = vpop.permute.xlu0 %229
        %231 = vrot.lane.b32.xlu0 %v219, 1
        %v232 = vpop.permute.xlu0 %231
        %vm233 = vcmp.lt.s32.totalorder %v190, 1
        %v234 = vsel %vm233, %v230, %v232
        %v235 = vsel %vm233, %v232, %v230
        %v236 = vsel %vm198, %v227, %v235
        %v237 = vsel %vm199, %v228, %v234
        %v238 = vsel %vm200, %v235, %v227
        %v239 = vsel %vm201, %v234, %v228
        %240 = vst [vmem:[#allocation2] sm:$0xf] %v236
        %241 = vst [vmem:[#allocation2 + $0x8] sm:$0xf] %v237
        %v244 = vrot.slane %v218, 4
        %v245 = vrot.slane %v219, 4
        %248 = vst [vmem:[#allocation2] sm:$0xf0] %v244
        %249 = vst [vmem:[#allocation2 + $0x8] sm:$0xf0] %v245
        %250 = vst [vmem:[#allocation2 + $0x10] sm:$0xf] %v238
        %251 = vst [vmem:[#allocation2 + $0x18] sm:$0xf] %v239
        %252 = vrot.lane.b32.xlu0 %v188, 127
        %v253 = vpop.permute.xlu0 %252
        %254 = vrot.lane.b32.xlu0 %v203, 127
        %v255 = vpop.permute.xlu0 %254
        %v256 = vsel %vm226, %v253, %v255
        %v257 = vsel %vm226, %v255, %v253
        %258 = vrot.lane.b32.xlu0 %v188, 1
        %v259 = vpop.permute.xlu0 %258
        %260 = vrot.lane.b32.xlu0 %v203, 1
        %v261 = vpop.permute.xlu0 %260
        %v262 = vsel %vm233, %v259, %v261
        %v263 = vsel %vm233, %v261, %v259
        %v264 = vsel %vm198, %v256, %v263
        %v265 = vsel %vm199, %v257, %v262
        %v266 = vsel %vm200, %v263, %v256
        %v267 = vsel %vm201, %v262, %v257
        %v270 = vrot.slane %v264, 4
        %v271 = vrot.slane %v265, 4
        %274 = vst [vmem:[#allocation2 + $0x10] sm:$0xf0] %v270
        %275 = vst [vmem:[#allocation2 + $0x18] sm:$0xf0] %v271
        %276 = vst [vmem:[#allocation2 + $0x20] sm:$0xf] %v188
        %277 = vst [vmem:[#allocation2 + $0x28] sm:$0xf] %v203
        %v280 = vrot.slane %v266, 4
        %v281 = vrot.slane %v267, 4
        %284 = vst [vmem:[#allocation2 + $0x20] sm:$0xf0] %v280
        %285 = vst [vmem:[#allocation2 + $0x28] sm:$0xf0] %v281
        %286 = vrot.lane.b32.xlu0 %v220, 127
        %v287 = vpop.permute.xlu0 %286
        %288 = vrot.lane.b32.xlu0 %v221, 127
        %v289 = vpop.permute.xlu0 %288
        %v290 = vsel %vm226, %v287, %v289
        %v291 = vsel %vm226, %v289, %v287
        %292 = vrot.lane.b32.xlu0 %v220, 1
        %v293 = vpop.permute.xlu0 %292
        %294 = vrot.lane.b32.xlu0 %v221, 1
        %v295 = vpop.permute.xlu0 %294
        %v296 = vsel %vm233, %v293, %v295
        %v297 = vsel %vm233, %v295, %v293
        %v298 = vsel %vm198, %v290, %v297
        %v299 = vsel %vm199, %v291, %v296
        %v300 = vsel %vm200, %v297, %v290
        %v301 = vsel %vm201, %v296, %v291
        %302 = vst [vmem:[#allocation2 + $0x30] sm:$0xf] %v298
        %303 = vst [vmem:[#allocation2 + $0x38] sm:$0xf] %v299
        %v306 = vrot.slane %v220, 4
        %v307 = vrot.slane %v221, 4
        %310 = vst [vmem:[#allocation2 + $0x30] sm:$0xf0] %v306
        %311 = vst [vmem:[#allocation2 + $0x38] sm:$0xf0] %v307
        %312 = vst [vmem:[#allocation2 + $0x40] sm:$0xf] %v300
        %313 = vst [vmem:[#allocation2 + $0x48] sm:$0xf] %v301
        %v314 = vld [vmem:[%s1] sm:$0xf]
        %v315 = vpack.c.bf16 %v314, %v314
        %v316 = vld [vmem:[#allocation2] sm:$0xff]
        %v317 = vld [vmem:[#allocation2 + $0x8] sm:$0xff]
        %v318 = vld [vmem:[#allocation2 + $0x10] sm:$0xff]
        %v319 = vld [vmem:[#allocation2 + $0x18] sm:$0xff]
        %v320 = vld [vmem:[#allocation2 + $0x20] sm:$0xff]
        %v321 = vld [vmem:[#allocation2 + $0x28] sm:$0xff]
        %v322 = vld [vmem:[#allocation2 + $0x30] sm:$0xff]
        %v323 = vld [vmem:[#allocation2 + $0x38] sm:$0xff]
        %v324 = vld [vmem:[#allocation2 + $0x40] sm:$0xf]
        %v325 = vld [vmem:[#allocation2 + $0x48] sm:$0xf]
        %v326 = vpack.c.bf16 %v318, %v316
        %v327 = vpack.c.bf16 %v319, %v317
        %v328 = vpack.c.bf16 %v322, %v320
        %v329 = vpack.c.bf16 %v323, %v321
        %v330 = vpack.c.bf16 %v324, %v324
        %v331 = vpack.c.bf16 %v325, %v325
        %v332 = vld [vmem:[%s2] sm:$0xf]
        %334 = vset.pattern.permute.xlu0 0
        %335 = vperm.xlu0 %334, %v332
        %v336 = vpop.permute.xlu0 %335
        %vm338 = vcmask 293888
        %v340 = vsel %vm338, %v315, 0
        %vm342 = vcmask 1041408
        %v344 = vsel %vm342, %v330, 0
        %v347 = vsel %vm342, %v331, 0
        %349 = vmatprep.subr.bf16.mxu0 %v327
        %350 = vmatpush1.bf16.msra.mxu0 %v326
        %351 = vmatprep.subr.bf16.mxu0 %v329
        %352 = vmatpush1.bf16.msra.mxu0 %v328
        %353 = vmatprep.subr.bf16.mxu0 %v347
        %354 = vmatpush1.bf16.msra.mxu0 %v344
        %355 = vmatprep.subr.bf16.mxu0 0
        %356 = vmatpush1.bf16.msra.mxu0 0
        %357 = vmatprep.subr.bf16.mxu0 0
        %358 = vmatpush1.bf16.msra.mxu0 0
        %359 = vmatprep.subr.bf16.mxu0 0
        %360 = vmatpush1.bf16.msra.mxu0 0
        %361 = vmatprep.subr.bf16.mxu0 0
        %362 = vmatpush1.bf16.msra.mxu0 0
        %363 = vmatprep.subr.bf16.mxu0 0
        %364 = vmatpush1.bf16.msra.mxu0 0
        %365 = vmatprep.subr.bf16.mxu0 0
        %366 = vmatpush1.bf16.msra.mxu0 0
        %367 = vmatprep.subr.bf16.mxu0 0
        %368 = vmatpush1.bf16.msra.mxu0 0
        %369 = vmatprep.subr.bf16.mxu0 0
        %370 = vmatpush1.bf16.msra.mxu0 0
        %371 = vmatprep.subr.bf16.mxu0 0
        %372 = vmatpush1.bf16.msra.mxu0 0
        %373 = vmatprep.subr.bf16.mxu0 0
        %374 = vmatpush1.bf16.msra.mxu0 0
        %375 = vmatprep.subr.bf16.mxu0 0
        %376 = vmatpush1.bf16.msra.mxu0 0
        %377 = vmatprep.subr.bf16.mxu0 0
        %378 = vmatpush1.bf16.msra.mxu0 0
        %379 = vmatprep.subr.bf16.mxu0 0
        %380 = vmatpush1.bf16.msra.mxu0 0
        %381 = vmatprep.mubr.bf16.mxu0 0
        %382 = vmatmul.mubr.bf16.gmra.mrb[0].mxu0 %v340
        %v383 = vpop.f32.mrb[0].mxu0
        %v384 = vadd.f32 %v336, %v383
        %v385 = vpop.f32.mrb[0].mxu0
        %v386 = vadd.f32 %v336, %v385
        %v387 = vpop.f32.mrb[0].mxu0
        %v388 = vpop.f32.mrb[0].mxu0
        %389 = vdwg.mxu0
        %vm390 = vcmask 1043456
        %v391 = vsel %vm390, %v384, 0.0
        %v392 = vsel %vm390, %v386, 0.0
        %v393 = vadd.f32 %v391, %v392
        %394 = vadd.xlane.f32.xlu0 %v393
        %v395 = vpop.xlane.xlu0 %394
        %v396 = vrcp.pop 256.0
        %v397 = vmul.f32 %v395, %v396
        %v398 = vsub.f32 %v384, %v397
        %v399 = vsub.f32 %v386, %v397
        %v400 = vmul.f32 %v398, %v398
        %v401 = vmul.f32 %v399, %v399
        %v402 = vsel %vm390, %v400, 0.0
        %v403 = vsel %vm390, %v401, 0.0
        %v404 = vadd.f32 %v402, %v403
        %405 = vadd.xlane.f32.xlu0 %v404
        %v406 = vpop.xlane.xlu0 %405
        %v407 = vmul.f32 %v406, %v396
        %v408 = vadd.f32 %v407, 1e-05
        %v409 = vrsqrt.pop %v408
        %v410 = vmul.f32 %v398, %v409
        %v411 = vmul.f32 %v399, %v409
        %v412 = vmax.f32 %v410, 0.0
        %v413 = vmax.f32 %v411, 0.0
        %v416 = vcombine.low %v412, %v413
        %v418 = vadd.f32 %v188, %v416
        %419 = vst [vmem:[%s186] sm:$0xff] %v418
        %s420 = sand.u32 %s96, 1
        %s421 = scalar_lea.sflag [#allocation5], %s420
        %s422 = sand.u32 %s96, 1
        %s423 = smul.addr %s422, 8
        %s424 = scalar_lea.vmem [#allocation6], %s423
        // Predicated region
        $region37: #{tpu_custom_call.1} parent=31 // pred_check
          %p425 = pneg %p106
        $region38: #{tpu_custom_call.1} parent=31 // pred_check_branch
          %427 = sbr.rel (%p425) target = $region40
        $region39: #{tpu_custom_call.1} parent=31 // pred_region
          %s429 = ssub.s32 128, 128
          %430 = vsyncadd %s421, %s429
          %s431 = smul.addr %s20, 2
          %s432 = smul.addr %s431, 64
          %s433 = scalar_lea.hbm %s3, %s432
          %s435 = sshll.u32 %s424, 4
          %s436 = int_to_ptr.vmem [resolvable:$true] %s435
          %438 = dma.vmem_to_hbm [thread:$0]  %s436, 128, %s433, %s421
        $region40: #{tpu_custom_call.1} parent=31 // pred_fallthru
          _
      $region32: #{tpu_custom_call.1} parent=5 // pred_fallthru
        _
      %p439 = scmp.le.s32.totalorder 2, %s15
      // Predicated region
      $region41: #{tpu_custom_call.1} parent=5 // pred_check
        %p440 = pneg %p439
      $region42: #{tpu_custom_call.1} parent=5 // pred_check_branch
        %442 = sbr.rel (%p440) target = $region44
      $region43: #{tpu_custom_call.1} parent=5 // pred_region
        %s443 = ssub.s32 %s15, 2
        // Predicated region
        $region45: #{tpu_custom_call.1} parent=43 // pred_check
          %p444 = pneg %p112
        $region46: #{tpu_custom_call.1} parent=43 // pred_check_branch
          %446 = sbr.rel (%p444) target = $region48
        $region47: #{tpu_custom_call.1} parent=43 // pred_region
          %s447 = sand.u32 %s97, 1
          %s448 = scalar_lea.sflag [#allocation5], %s447
          %s449 = sand.u32 %s97, 1
          %s450 = smul.addr %s449, 8
          %s451 = scalar_lea.vmem [#allocation6], %s450
          %452 = dma.done %s448, 128
        $region48: #{tpu_custom_call.1} parent=43 // pred_fallthru
          _
      $region44: #{tpu_custom_call.1} parent=5 // pred_fallthru
        _
    $region6: #{tpu_custom_call.1} parent=1 // loop_footer
      %s19 = sadd.s32 1, %s15
    $region7: #{tpu_custom_call.1} parent=1 // loop_footer_branch
      %14 = sbr.rel target = $region3
    $region8: #{tpu_custom_call.1} parent=1 // loop_exit
      _
    %453 = vsyncpa [#allocation4], 1
    %s454 = scalar_lea.sflag [#allocation4], 1
    %455 = vsyncpa %s454, 1
    %456 = vsyncpa [#allocation5], 1
    %s457 = scalar_lea.sflag [#allocation5], 1
    %458 = vsyncpa %s457, 1

</llo_original>
